<compile_context>
chip_gen: v7x
topology: tpu7x:2x2x1
jax: 0.10.0
libtpu: 0.0.40
codegen_flags: <defaults>
</compile_context>

<pallas_src>
import jax
import jax.numpy as jnp
from jax import lax
from jax.experimental import pallas as pl
from jax.experimental.pallas import tpu as pltpu

HIDDEN1 = 64
HIDDEN2 = 16
OUTPUT_SIZE = 1


def _round_up(n: int, m: int) -> int:
    return ((n + m - 1) // m) * m


def _activation(v, activef: str):
    if activef == "ReLU":
        return jnp.maximum(v, 0.0)
    if activef == "sigmoid":
        return jax.nn.sigmoid(v)
    if activef == "tanh":
        return jnp.tanh(v)
    # Matches the PyTorch module: unknown activef falls through as identity.
    return v


def _make_net_kernel(activef: str):
    """Fused 3-layer MLP kernel body operating on one (TB, in) batch tile."""

    def kernel(x_ref, w1_ref, b1_ref, w2_ref, b2_ref, w3_ref, b3_ref, o_ref):
        x = x_ref[...]                                            # (TB, in) compute dtype

        # fc1: (TB, in) @ (in, 64) + (1, 64), f32 accumulation on the MXU.
        h1 = jnp.dot(x, w1_ref[...], preferred_element_type=jnp.float32)
        h1 = _activation(h1 + b1_ref[...], activef).astype(w2_ref.dtype)

        # fc2: (TB, 64) @ (64, 16) + (1, 16)
        h2 = jnp.dot(h1, w2_ref[...], preferred_element_type=jnp.float32)
        h2 = _activation(h2 + b2_ref[...], activef).astype(w3_ref.dtype)

        # fc3 computed transposed: (1, 16) contracted with (TB, 16) on the last dims
        # -> (1, TB).  Same math as h2 @ W3^T but the per-tile result is lane-dense,
        # so the output store uses full 128-lane vregs instead of masked (TB, 1) stores.
        # (If a bundle dump ever shows an XLU transpose chain here, fall back to
        #  h2 @ w3.T into a (TB, 1) block.)
        out_t = lax.dot_general(
            w3_ref[...], h2,
            dimension_numbers=(((1,), (1,)), ((), ())),
            preferred_element_type=jnp.float32)                   # (1, TB)

        o_ref[0] = (out_t + b3_ref[...]).astype(o_ref.dtype)      # block (1, 1, TB)

    return kernel


def _tpu_budgets():
    """Generation-aware (x-stream VMEM budget, scoped vmem limit, TC-per-chip guess)."""
    try:
        vmem_cap = int(pltpu.get_tpu_info().vmem_capacity_bytes)
    except Exception:
        vmem_cap = 64 * 1024 * 1024          # conservative default (v7x-sized)
    if vmem_cap <= 64 * 1024 * 1024:
        # v7x-class: 64 MiB VMEM per TensorCore, 2 TensorCores per chip.
        return 16 * 1024 * 1024, 48 * 1024 * 1024, 2
    # v5e / v6e: 128 MiB VMEM, single TensorCore.
    return 32 * 1024 * 1024, 64 * 1024 * 1024, 1


def _run_mlp(x_arr, tb, num_tiles, weights, activef, vmem_limit, in_size, itemsize):
    """One pallas_call over `num_tiles` full (tb, in) tiles of x_arr (rows beyond
    num_tiles*tb are simply never visited)."""
    w1, b1, w2, b2, w3, b3 = weights
    rows = num_tiles * tb

    cost = pl.CostEstimate(
        flops=2 * rows * (in_size * HIDDEN1 + HIDDEN1 * HIDDEN2 + HIDDEN2 * OUTPUT_SIZE),
        transcendentals=rows * (HIDDEN1 + HIDDEN2) if activef in ("sigmoid", "tanh") else 0,
        bytes_accessed=rows * in_size * itemsize + rows * OUTPUT_SIZE * 4
        + sum(int(w.size) * jnp.dtype(w.dtype).itemsize for w in weights),
    )

    # Weights/biases: full-extent blocks pinned to block (0, 0, ...) => VMEM-resident.
    def resident(shape):
        return pl.BlockSpec(shape, lambda i: tuple(0 for _ in shape))

    out3d = pl.pallas_call(
        _make_net_kernel(activef),
        out_shape=jax.ShapeDtypeStruct((num_tiles, 1, tb), jnp.float32),
        grid=(num_tiles,),
        in_specs=[
            pl.BlockSpec((tb, in_size), lambda i: (i, 0)),   # streamed x tiles
            resident(w1.shape),
            resident(b1.shape),
            resident(w2.shape),
            resident(b2.shape),
            resident(w3.shape),
            resident(b3.shape),
        ],
        out_specs=pl.BlockSpec((1, 1, tb), lambda i: (i, 0, 0)),
        compiler_params=pltpu.CompilerParams(
            dimension_semantics=("parallel",),               # megacore sharding on v7x
            vmem_limit_bytes=vmem_limit,
        ),
        cost_estimate=cost,
    )(x_arr, w1, b1, w2, b2, w3, b3)

    # (num_tiles, 1, tb) row-major == batch order -> (rows, 1)
    return out3d.reshape(rows, OUTPUT_SIZE)


def net_reference(x, params, activef: str):
    """Plain-JAX reference for correctness checking."""
    if activef == "ReLU":
        act = lambda v: jnp.maximum(v, 0.0)
    elif activef == "sigmoid":
        act = jax.nn.sigmoid
    elif activef == "tanh":
        act = jnp.tanh
    else:
        act = lambda v: v
    h1 = act(x @ params["w1"] + params["b1"])
    h2 = act(h1 @ params["w2"] + params["b2"])
    return h2 @ params["w3"].T + params["b3"]


def net_forward(x, params, activef: str, *, tile_batch=None,
                compute_dtype=jnp.float32):
    """Fused Pallas forward pass of Net.

    Args:
      x: [batch, input_size] float32
      params: dict with w1 [in,64], b1 [1,64], w2 [64,16], b2 [1,16],
              w3 [1,16] (PyTorch [out,in] layout), b3 [1,1]
      activef: 'ReLU' | 'sigmoid' | 'tanh'
      tile_batch: optional cap on the batch tile (None => pick the largest safe tile)
      compute_dtype: dtype used to stream x / weights (f32 default; bf16 halves the HBM
                     read but breaks the 1e-5 tolerance vs the f32 reference)
    Returns:
      [batch, 1] float32
    """
    B, in_size = x.shape
    itemsize = jnp.dtype(compute_dtype).itemsize
    padded_in = _round_up(max(in_size, 1), 128)     # lane padding of the x tile in VMEM

    stream_budget, vmem_limit, cores_per_chip = _tpu_budgets()

    # Guard: weights + a minimal (128, in) double-buffered x tile must fit VMEM.
    min_footprint = (2 * 128 * padded_in * itemsize                 # x double-buffer
                     + padded_in * 128 * 4                          # w1 (64 -> 128 lanes)
                     + 4 * 128 * 128 * 4)                           # w2/w3/biases/out, generous
    if min_footprint > vmem_limit:
        # TODO(synk): add a feature-dim (K) reduction grid axis for very large input_size.
        return net_reference(x.astype(jnp.float32), params, activef)

    # --- pick the batch tile size ---------------------------------------------------
    # Double-buffered x stream: 2 * tb * padded_in * itemsize <= stream_budget.
    max_tb = max(128, min(32 * 1024,
                          (stream_budget // (2 * itemsize * padded_in)) // 128 * 128))
    tb = min(max_tb, _round_up(B, 128))
    if B >= 128:
        tb = min(tb, (B // 128) * 128)          # tb <= B: main (un-padded) call covers most rows
    if tile_batch is not None:
        tb = min(tb, max(128, _round_up(tile_batch, 128)))
    if cores_per_chip > 1 and B >= cores_per_chip * 128:
        # Keep >= cores_per_chip tiles so the "parallel" axis can shard across TCs (v7x).
        tb = min(tb, max(128, (B // cores_per_chip) // 128 * 128))
    tb = max(tb, 128)

    # --- prepare operands -----------------------------------------------------------
    x_c = x.astype(compute_dtype)               # no-op copy for the default f32 path
    weights = (
        params["w1"].astype(compute_dtype),
        params["b1"].astype(jnp.float32),
        params["w2"].astype(compute_dtype),
        params["b2"].astype(jnp.float32),
        params["w3"].astype(compute_dtype),
        params["b3"].astype(jnp.float32),
    )

    outs = []

    # Main call: floor(B / tb) full tiles, read directly from x (no pad / copy of x).
    main_rows = (B // tb) * tb
    if main_rows > 0:
        outs.append(_run_mlp(x_c, tb, main_rows // tb, weights, activef,
                             vmem_limit, in_size, itemsize))

    # Tail call: only the remainder rows are padded (tiny copy), one extra tile.
    rem = B - main_rows
    if rem > 0:
        tb_tail = _round_up(rem, 128)
        x_tail = jnp.pad(x_c[main_rows:], ((0, tb_tail - rem), (0, 0)))
        out_tail = _run_mlp(x_tail, tb_tail, 1, weights, activef,
                            vmem_limit, in_size, itemsize)[:rem]
        outs.append(out_tail)

    return outs[0] if len(outs) == 1 else jnp.concatenate(outs, axis=0)


def init_params(key, input_size: int):
    """Deterministic init mimicking nn.Linear's U(-1/sqrt(fan_in), 1/sqrt(fan_in)).

    w1/w2 are stored as [in, out] (transposed vs PyTorch); w3 is stored in the
    PyTorch-native [out, in] = [1, 16] layout for the transposed fc3 matmul.
    """
    ks = jax.random.split(key, 6)

    def uni(k, shape, fan_in):
        bound = 1.0 / jnp.sqrt(float(fan_in))
        return jax.random.uniform(k, shape, jnp.float32, -bound, bound)

    w1 = uni(ks[0], (input_size, HIDDEN1), input_size)
    b1 = uni(ks[1], (1, HIDDEN1), input_size)
    w2 = uni(ks[2], (HIDDEN1, HIDDEN2), HIDDEN1)
    b2 = uni(ks[3], (1, HIDDEN2), HIDDEN1)
    w3 = uni(ks[4], (OUTPUT_SIZE, HIDDEN2), HIDDEN2)   # [out, in]
    b3 = uni(ks[5], (1, OUTPUT_SIZE), HIDDEN2)
    return {"w1": w1, "b1": b1, "w2": w2, "b2": b2, "w3": w3, "b3": b3}


if __name__ == "__main__":
    key = jax.random.PRNGKey(0)
    k_param, k_x1, k_x2, k_x3 = jax.random.split(key, 4)

    input_size = 32
    params = init_params(k_param, input_size)

    # Case 1: tiny batch (single padded tail tile only), tanh.
    x_small = jax.random.normal(k_x1, (8, input_size), jnp.float32)
    out_small = jax.block_until_ready(net_forward(x_small, params, "tanh"))
    ref_small = net_reference(x_small, params, "tanh")
    assert out_small.shape == (8, 1), out_small.shape
    assert jnp.allclose(out_small, ref_small, atol=1e-5, rtol=1e-5)

    # Case 2: forced small tiles (multi-step main grid + padded tail call), ReLU.
    x_mid = jax.random.normal(k_x2, (300, input_size), jnp.float32)
    out_mid = jax.block_until_ready(
        net_forward(x_mid, params, "ReLU", tile_batch=128))
    ref_mid = net_reference(x_mid, params, "ReLU")
    assert out_mid.shape == (300, 1), out_mid.shape
    assert jnp.allclose(out_mid, ref_mid, atol=1e-5, rtol=1e-5)

    # Case 3: default (auto, large) tile selection path, sigmoid.
    x_big = jax.random.normal(k_x3, (1000, input_size), jnp.float32)
    out_big = jax.block_until_ready(net_forward(x_big, params, "sigmoid"))
    ref_big = net_reference(x_big, params, "sigmoid")
    assert out_big.shape == (1000, 1), out_big.shape
    assert jnp.allclose(out_big, ref_big, atol=1e-5, rtol=1e-5)

    print("KERNEL_OK")
</pallas_src>

<mosaic_0001>
module attributes {stable_mosaic.version = 11 : i64} {
  func.func @kernel(%arg0: i32, %arg1: memref<128x32xf32, #tpu.memory_space<vmem>>, %arg2: memref<32x64xf32, #tpu.memory_space<vmem>>, %arg3: memref<1x64xf32, #tpu.memory_space<vmem>>, %arg4: memref<64x16xf32, #tpu.memory_space<vmem>>, %arg5: memref<1x16xf32, #tpu.memory_space<vmem>>, %arg6: memref<1x16xf32, #tpu.memory_space<vmem>>, %arg7: memref<1x1xf32, #tpu.memory_space<vmem>>, %arg8: memref<1x1x128xf32, #tpu.memory_space<vmem>>) attributes {dimension_semantics = [#tpu.dimension_semantics<parallel>], iteration_bounds = array<i64: 1>, scalar_prefetch = 0 : i64, scratch_operands = 0 : i64, tpu.core_type = #tpu.core_type<tc>, window_params = [{transform_indices = @transform_0, window_bounds = array<i64: 128, 32>}, {pipeline_mode = #tpu.pipeline_mode<synchronous>, transform_indices = @transform_1, window_bounds = array<i64: 32, 64>}, {pipeline_mode = #tpu.pipeline_mode<synchronous>, transform_indices = @transform_2, window_bounds = array<i64: 1, 64>}, {pipeline_mode = #tpu.pipeline_mode<synchronous>, transform_indices = @transform_3, window_bounds = array<i64: 64, 16>}, {pipeline_mode = #tpu.pipeline_mode<synchronous>, transform_indices = @transform_4, window_bounds = array<i64: 1, 16>}, {pipeline_mode = #tpu.pipeline_mode<synchronous>, transform_indices = @transform_5, window_bounds = array<i64: 1, 16>}, {pipeline_mode = #tpu.pipeline_mode<synchronous>, transform_indices = @transform_6, window_bounds = array<i64: 1, 1>}, {transform_indices = @transform_7, window_bounds = array<i64: 1, 1, 128>}]} {
    %c0 = arith.constant 0 : index
    %c0_0 = arith.constant 0 : index
    %0 = vector.load %arg1[%c0, %c0_0] : memref<128x32xf32, #tpu.memory_space<vmem>>, vector<128x32xf32>
    %c0_1 = arith.constant 0 : index
    %c0_2 = arith.constant 0 : index
    %1 = vector.load %arg2[%c0_1, %c0_2] : memref<32x64xf32, #tpu.memory_space<vmem>>, vector<32x64xf32>
    %cst = arith.constant dense<0.000000e+00> : vector<128x64xf32>
    %2 = tpu.matmul %0, %1, %cst {dimension_numbers = #tpu.dot_dimension_numbers<[1], [0], [0], [1], [0, 0, 1, 1], [], []>} : vector<128x32xf32>, vector<32x64xf32>, vector<128x64xf32> -> vector<128x64xf32>
    %c0_3 = arith.constant 0 : index
    %c0_4 = arith.constant 0 : index
    %3 = vector.load %arg3[%c0_3, %c0_4] : memref<1x64xf32, #tpu.memory_space<vmem>>, vector<1x64xf32>
    %4 = vector.broadcast %3 : vector<1x64xf32> to vector<128x64xf32>
    %5 = arith.addf %2, %4 : vector<128x64xf32>
    %6 = math.tanh %5 : vector<128x64xf32>
    %c0_5 = arith.constant 0 : index
    %c0_6 = arith.constant 0 : index
    %7 = vector.load %arg4[%c0_5, %c0_6] : memref<64x16xf32, #tpu.memory_space<vmem>>, vector<64x16xf32>
    %cst_7 = arith.constant dense<0.000000e+00> : vector<128x16xf32>
    %8 = tpu.matmul %6, %7, %cst_7 {dimension_numbers = #tpu.dot_dimension_numbers<[1], [0], [0], [1], [0, 0, 1, 1], [], []>} : vector<128x64xf32>, vector<64x16xf32>, vector<128x16xf32> -> vector<128x16xf32>
    %c0_8 = arith.constant 0 : index
    %c0_9 = arith.constant 0 : index
    %9 = vector.load %arg5[%c0_8, %c0_9] : memref<1x16xf32, #tpu.memory_space<vmem>>, vector<1x16xf32>
    %10 = vector.broadcast %9 : vector<1x16xf32> to vector<128x16xf32>
    %11 = arith.addf %8, %10 : vector<128x16xf32>
    %12 = math.tanh %11 : vector<128x16xf32>
    %c0_10 = arith.constant 0 : index
    %c0_11 = arith.constant 0 : index
    %13 = vector.load %arg6[%c0_10, %c0_11] : memref<1x16xf32, #tpu.memory_space<vmem>>, vector<1x16xf32>
    %cst_12 = arith.constant dense<0.000000e+00> : vector<1x128xf32>
    %14 = tpu.matmul %13, %12, %cst_12 {dimension_numbers = #tpu.dot_dimension_numbers<[1], [1], [0], [0], [0, 0, 1, 0], [], []>} : vector<1x16xf32>, vector<128x16xf32>, vector<1x128xf32> -> vector<1x128xf32>
    %c0_13 = arith.constant 0 : index
    %c0_14 = arith.constant 0 : index
    %15 = vector.load %arg7[%c0_13, %c0_14] : memref<1x1xf32, #tpu.memory_space<vmem>>, vector<1x1xf32>
    %16 = vector.broadcast %15 : vector<1x1xf32> to vector<1x128xf32>
    %17 = arith.addf %14, %16 : vector<1x128xf32>
    %c0_15 = arith.constant 0 : index
    %c0_16 = arith.constant 0 : index
    %c0_17 = arith.constant 0 : index
    %18 = vector.load %arg8[%c0_15, %c0_16, %c0_17] : memref<1x1x128xf32, #tpu.memory_space<vmem>>, vector<1x1x128xf32>
    %19 = vector.shape_cast %18 : vector<1x1x128xf32> to vector<1x128xf32>
    %20 = vector.shape_cast %17 : vector<1x128xf32> to vector<1x1x128xf32>
    tpu.vector_store %arg8[%c0_15, %c0_16, %c0_17], %20 {strides = array<i32>} : memref<1x1x128xf32, #tpu.memory_space<vmem>>, vector<1x1x128xf32>,
    return
  }
  func.func @transform_0(%arg0: i32) -> (i32, i32) {
    %c0_i32 = arith.constant 0 : i32
    %c0_i32_0 = arith.constant 0 : i32
    return %arg0, %c0_i32 : i32, i32
  }
  func.func @transform_1(%arg0: i32) -> (i32, i32) {
    %c0_i32 = arith.constant 0 : i32
    %c0_i32_0 = arith.constant 0 : i32
    %c0_i32_1 = arith.constant 0 : i32
    return %c0_i32, %c0_i32_0 : i32, i32
  }
  func.func @transform_2(%arg0: i32) -> (i32, i32) {
    %c0_i32 = arith.constant 0 : i32
    %c0_i32_0 = arith.constant 0 : i32
    %c0_i32_1 = arith.constant 0 : i32
    return %c0_i32, %c0_i32_0 : i32, i32
  }
  func.func @transform_3(%arg0: i32) -> (i32, i32) {
    %c0_i32 = arith.constant 0 : i32
    %c0_i32_0 = arith.constant 0 : i32
    %c0_i32_1 = arith.constant 0 : i32
    return %c0_i32, %c0_i32_0 : i32, i32
  }
  func.func @transform_4(%arg0: i32) -> (i32, i32) {
    %c0_i32 = arith.constant 0 : i32
    %c0_i32_0 = arith.constant 0 : i32
    %c0_i32_1 = arith.constant 0 : i32
    return %c0_i32, %c0_i32_0 : i32, i32
  }
  func.func @transform_5(%arg0: i32) -> (i32, i32) {
    %c0_i32 = arith.constant 0 : i32
    %c0_i32_0 = arith.constant 0 : i32
    %c0_i32_1 = arith.constant 0 : i32
    return %c0_i32, %c0_i32_0 : i32, i32
  }
  func.func @transform_6(%arg0: i32) -> (i32, i32) {
    %c0_i32 = arith.constant 0 : i32
    %c0_i32_0 = arith.constant 0 : i32
    %c0_i32_1 = arith.constant 0 : i32
    return %c0_i32, %c0_i32_0 : i32, i32
  }
  func.func @transform_7(%arg0: i32) -> (i32, i32, i32) {
    %c0_i32 = arith.constant 0 : i32
    %c0_i32_0 = arith.constant 0 : i32
    %c0_i32_1 = arith.constant 0 : i32
    return %arg0, %c0_i32, %c0_i32_0 : i32, i32, i32
  }
}

</mosaic_0001>

<llo_original>
// kernel: tpu_custom_call.1
$region0: #{tpu_custom_call.1}
  #allocation0 [shape = 'u32[]', space=smem, size = 0x4, offset = 0x4, fixed_abs, tag = 'smem constant byte address 0x4 - core index']
  #allocation1 [shape = 'u32[144,128]{1,0:T(1,128)}', space=vmem, size = 0x12000, scoped, tag = 'internal scratch']
  #allocation2 [shape = 'f32[1,1]{1,0:T(1,128)S(1)}', space=vmem, size = 0x200, scoped, tag = 'scoped memory for tpu_custom_call.1']
  %s0 = inlined_call_operand.vmem [shape: f32[128,32], index: 0, kind: input, shape index: {}]
  %s1 = inlined_call_operand.vmem [shape: f32[32,64], index: 1, kind: input, shape index: {}]
  %s2 = inlined_call_operand.vmem [shape: f32[1,64], index: 2, kind: input, shape index: {}]
  %s3 = inlined_call_operand.vmem [shape: f32[64,16], index: 3, kind: input, shape index: {}]
  %s4 = inlined_call_operand.vmem [shape: f32[1,16], index: 4, kind: input, shape index: {}]
  %s5 = inlined_call_operand.vmem [shape: f32[1,16], index: 5, kind: input, shape index: {}]
  %s6 = inlined_call_operand.<no memory space> [shape: f32[1,1], index: 6, kind: input, shape index: {}]
  %s7 = inlined_call_operand.hbm [shape: f32[1,1,128], index: 7, kind: output, shape index: {}]
  %s8 = sld [smem:[#allocation0]]
  $region38: #{tpu_custom_call.1} parent=0
    _
  %s10 = ssub.s32 1, %s8
  %s11 = scalar_select 0, %s10, %s8
  %v12 = vstv %s6
  %13 = vst [vmem:[#allocation2] sm:$0x1] %v12
  $region1: #{tpu_custom_call.1} parent=0
    #allocation3 [shape = 'u8[512]{0}', space=vmem, size = 0x400, scoped, tag = 'output window, operand 0, single buffered']
    #allocation4 [shape = 's32[1]{0}', space=sflag, size = 0x4, scoped, tag = 'scoped memory for tpu_custom_call.1']
    %14 = vsyncpa [#allocation4], 0
    // Predicated region
    $region2: #{tpu_custom_call.1} parent=1 // pred_check
      _
    $region3: #{tpu_custom_call.1} parent=1 // pred_check_branch
      %16 = sbr.rel (0) target = $region5
    $region4: #{tpu_custom_call.1} parent=1 // pred_region
      _
    $region5: #{tpu_custom_call.1} parent=1 // pred_fallthru
      _
    // Predicated region
    $region6: #{tpu_custom_call.1} parent=1 // pred_check
      _
    $region7: #{tpu_custom_call.1} parent=1 // pred_check_branch
      %18 = sbr.rel (0) target = $region9
    $region8: #{tpu_custom_call.1} parent=1 // pred_region
      _
    $region9: #{tpu_custom_call.1} parent=1 // pred_fallthru
      _
    // Predicated region
    $region10: #{tpu_custom_call.1} parent=1 // pred_check
      _
    $region11: #{tpu_custom_call.1} parent=1 // pred_check_branch
      %20 = sbr.rel (0) target = $region13
    $region12: #{tpu_custom_call.1} parent=1 // pred_region
      _
    $region13: #{tpu_custom_call.1} parent=1 // pred_fallthru
      _
    // Predicated region
    $region14: #{tpu_custom_call.1} parent=1 // pred_check
      _
    $region15: #{tpu_custom_call.1} parent=1 // pred_check_branch
      %22 = sbr.rel (0) target = $region17
    $region16: #{tpu_custom_call.1} parent=1 // pred_region
      _
    $region17: #{tpu_custom_call.1} parent=1 // pred_fallthru
      _
    // Predicated region
    $region18: #{tpu_custom_call.1} parent=1 // pred_check
      _
    $region19: #{tpu_custom_call.1} parent=1 // pred_check_branch
      %24 = sbr.rel (0) target = $region21
    $region20: #{tpu_custom_call.1} parent=1 // pred_region
      _
    $region21: #{tpu_custom_call.1} parent=1 // pred_fallthru
      _
    // Predicated region
    $region22: #{tpu_custom_call.1} parent=1 // pred_check
      _
    $region23: #{tpu_custom_call.1} parent=1 // pred_check_branch
      %26 = sbr.rel (0) target = $region25
    $region24: #{tpu_custom_call.1} parent=1 // pred_region
      _
    $region25: #{tpu_custom_call.1} parent=1 // pred_fallthru
      _
    // Predicated region
    $region26: #{tpu_custom_call.1} parent=1 // pred_check
      _
    $region27: #{tpu_custom_call.1} parent=1 // pred_check_branch
      %28 = sbr.rel (0) target = $region29
    $region28: #{tpu_custom_call.1} parent=1 // pred_region
      _
    $region29: #{tpu_custom_call.1} parent=1 // pred_fallthru
      _
    %v29 = vld [vmem:[%s0] sm:$0xff]
    %v30 = vld [vmem:[%s0 + $0x8] sm:$0xff]
    %v31 = vld [vmem:[%s0 + $0x10] sm:$0xff]
    %v32 = vld [vmem:[%s0 + $0x18] sm:$0xff]
    %v33 = vld [vmem:[%s0 + $0x20] sm:$0xff]
    %v34 = vld [vmem:[%s0 + $0x28] sm:$0xff]
    %v35 = vld [vmem:[%s0 + $0x30] sm:$0xff]
    %v36 = vld [vmem:[%s0 + $0x38] sm:$0xff]
    %v37 = vld [vmem:[%s0 + $0x40] sm:$0xff]
    %v38 = vld [vmem:[%s0 + $0x48] sm:$0xff]
    %v39 = vld [vmem:[%s0 + $0x50] sm:$0xff]
    %v40 = vld [vmem:[%s0 + $0x58] sm:$0xff]
    %v41 = vld [vmem:[%s0 + $0x60] sm:$0xff]
    %v42 = vld [vmem:[%s0 + $0x68] sm:$0xff]
    %v43 = vld [vmem:[%s0 + $0x70] sm:$0xff]
    %v44 = vld [vmem:[%s0 + $0x78] sm:$0xff]
    %v45 = vld [vmem:[%s1] sm:$0xff]
    %v46 = vld [vmem:[%s1 + $0x8] sm:$0xff]
    %v47 = vld [vmem:[%s1 + $0x10] sm:$0xff]
    %v48 = vld [vmem:[%s1 + $0x18] sm:$0xff]
    %v49 = vld [vmem:[%s2] sm:$0x1]
    %v51 = vlaneseq
    %v52 = vshrl.u32 %v51, 7
    %v53 = vsub.s32 0, %v52
    %v54 = vrot.slane %v49, %v53
    %vm56 = vcmask 261120
    %v58 = vsel %vm56, %v29, 0
    %v61 = vsel %vm56, %v30, 0
    %v64 = vsel %vm56, %v31, 0
    %v67 = vsel %vm56, %v32, 0
    %v70 = vsel %vm56, %v33, 0
    %v73 = vsel %vm56, %v34, 0
    %v76 = vsel %vm56, %v35, 0
    %v79 = vsel %vm56, %v36, 0
    %v82 = vsel %vm56, %v37, 0
    %v85 = vsel %vm56, %v38, 0
    %v88 = vsel %vm56, %v39, 0
    %v91 = vsel %vm56, %v40, 0
    %v94 = vsel %vm56, %v41, 0
    %v97 = vsel %vm56, %v42, 0
    %v100 = vsel %vm56, %v43, 0
    %v103 = vsel %vm56, %v44, 0
    %105 = vmatprep.subr.mxu0 0.0
    %106 = vmatpush1.msra.mxu0 %v45
    %107 = vmatprep.subr.mxu0 0.0
    %108 = vmatpush1.msra.mxu0 %v46
    %109 = vmatprep.subr.mxu0 0.0
    %110 = vmatpush1.msra.mxu0 %v47
    %111 = vmatprep.subr.mxu0 0.0
    %112 = vmatpush1.msra.mxu0 %v48
    %113 = vmatprep.subr.mxu0 0.0
    %114 = vmatpush1.msra.mxu0 0.0
    %115 = vmatprep.subr.mxu0 0.0
    %116 = vmatpush1.msra.mxu0 0.0
    %117 = vmatprep.subr.mxu0 0.0
    %118 = vmatpush1.msra.mxu0 0.0
    %119 = vmatprep.subr.mxu0 0.0
    %120 = vmatpush1.msra.mxu0 0.0
    %121 = vmatprep.subr.mxu0 0.0
    %122 = vmatpush1.msra.mxu0 0.0
    %123 = vmatprep.subr.mxu0 0.0
    %124 = vmatpush1.msra.mxu0 0.0
    %125 = vmatprep.subr.mxu0 0.0
    %126 = vmatpush1.msra.mxu0 0.0
    %127 = vmatprep.subr.mxu0 0.0
    %128 = vmatpush1.msra.mxu0 0.0
    %129 = vmatprep.subr.mxu0 0.0
    %130 = vmatpush1.msra.mxu0 0.0
    %131 = vmatprep.subr.mxu0 0.0
    %132 = vmatpush1.msra.mxu0 0.0
    %133 = vmatprep.subr.mxu0 0.0
    %134 = vmatpush1.msra.mxu0 0.0
    %135 = vmatprep.subr.mxu0 0.0
    %136 = vmatpush1.msra.mxu0 0.0
    %137 = vmatprep.subr.mxu0 0.0
    %138 = vmatpush1.msra.mxu0 0.0
    %139 = vmatprep.subr.mxu0 0.0
    %140 = vmatpush1.msra.mxu0 0.0
    %141 = vmatprep.subr.mxu0 0.0
    %142 = vmatpush1.msra.mxu0 0.0
    %143 = vmatprep.subr.mxu0 0.0
    %144 = vmatpush1.msra.mxu0 0.0
    %145 = vmatprep.subr.mxu0 0.0
    %146 = vmatpush1.msra.mxu0 0.0
    %147 = vmatprep.subr.mxu0 0.0
    %148 = vmatpush1.msra.mxu0 0.0
    %149 = vmatprep.subr.mxu0 0.0
    %150 = vmatpush1.msra.mxu0 0.0
    %151 = vmatprep.subr.mxu0 0.0
    %152 = vmatpush1.msra.mxu0 0.0
    %153 = vmatprep.subr.mxu0 0.0
    %154 = vmatpush1.msra.mxu0 0.0
    %155 = vmatprep.subr.mxu0 0.0
    %156 = vmatpush1.msra.mxu0 0.0
    %157 = vmatprep.subr.mxu0 0.0
    %158 = vmatpush1.msra.mxu0 0.0
    %159 = vmatprep.subr.mxu0 0.0
    %160 = vmatpush1.msra.mxu0 0.0
    %161 = vmatprep.subr.mxu0 0.0
    %162 = vmatpush1.msra.mxu0 0.0
    %163 = vmatprep.subr.mxu0 0.0
    %164 = vmatpush1.msra.mxu0 0.0
    %165 = vmatprep.subr.mxu0 0.0
    %166 = vmatpush1.msra.mxu0 0.0
    %167 = vmatprep.subr.mxu0 0.0
    %168 = vmatpush1.msra.mxu0 0.0
    %169 = vmatprep.mubr.f32.mxu0 0.0
    %170 = vmatmul.mubr.f32.gmra.mrb[0].mxu0 %v58
    %v171 = vpop.f32.mrb[0].mxu0
    %v172 = vadd.f32 %v54, %v171
    %v173 = vpop.f32.mrb[0].mxu0
    %174 = vmatprep.mubr.f32.mxu0 0.0
    %175 = vmatmul.mubr.f32.gmra.mrb[0].mxu0 %v61
    %v176 = vpop.f32.mrb[0].mxu0
    %v177 = vadd.f32 %v54, %v176
    %v178 = vpop.f32.mrb[0].mxu0
    %179 = vmatprep.mubr.f32.mxu0 0.0
    %180 = vmatmul.mubr.f32.gmra.mrb[0].mxu0 %v64
    %v181 = vpop.f32.mrb[0].mxu0
    %v182 = vadd.f32 %v54, %v181
    %v183 = vpop.f32.mrb[0].mxu0
    %184 = vmatprep.mubr.f32.mxu0 0.0
    %185 = vmatmul.mubr.f32.gmra.mrb[0].mxu0 %v67
    %v186 = vpop.f32.mrb[0].mxu0
    %v187 = vadd.f32 %v54, %v186
    %v188 = vpop.f32.mrb[0].mxu0
    %189 = vmatprep.mubr.f32.mxu0 0.0
    %190 = vmatmul.mubr.f32.gmra.mrb[0].mxu0 %v70
    %v191 = vpop.f32.mrb[0].mxu0
    %v192 = vadd.f32 %v54, %v191
    %v193 = vpop.f32.mrb[0].mxu0
    %194 = vmatprep.mubr.f32.mxu0 0.0
    %195 = vmatmul.mubr.f32.gmra.mrb[0].mxu0 %v73
    %v196 = vpop.f32.mrb[0].mxu0
    %v197 = vadd.f32 %v54, %v196
    %v198 = vpop.f32.mrb[0].mxu0
    %199 = vmatprep.mubr.f32.mxu0 0.0
    %200 = vmatmul.mubr.f32.gmra.mrb[0].mxu0 %v76
    %v201 = vpop.f32.mrb[0].mxu0
    %v202 = vadd.f32 %v54, %v201
    %v203 = vpop.f32.mrb[0].mxu0
    %204 = vmatprep.mubr.f32.mxu0 0.0
    %205 = vmatmul.mubr.f32.gmra.mrb[0].mxu0 %v79
    %v206 = vpop.f32.mrb[0].mxu0
    %v207 = vadd.f32 %v54, %v206
    %v208 = vpop.f32.mrb[0].mxu0
    %209 = vmatprep.mubr.f32.mxu0 0.0
    %210 = vmatmul.mubr.f32.gmra.mrb[0].mxu0 %v82
    %v211 = vpop.f32.mrb[0].mxu0
    %v212 = vadd.f32 %v54, %v211
    %v213 = vpop.f32.mrb[0].mxu0
    %214 = vmatprep.mubr.f32.mxu0 0.0
    %215 = vmatmul.mubr.f32.gmra.mrb[0].mxu0 %v85
    %v216 = vpop.f32.mrb[0].mxu0
    %v217 = vadd.f32 %v54, %v216
    %v218 = vpop.f32.mrb[0].mxu0
    %219 = vmatprep.mubr.f32.mxu0 0.0
    %220 = vmatmul.mubr.f32.gmra.mrb[0].mxu0 %v88
    %v221 = vpop.f32.mrb[0].mxu0
    %v222 = vadd.f32 %v54, %v221
    %v223 = vpop.f32.mrb[0].mxu0
    %224 = vmatprep.mubr.f32.mxu0 0.0
    %225 = vmatmul.mubr.f32.gmra.mrb[0].mxu0 %v91
    %v226 = vpop.f32.mrb[0].mxu0
    %v227 = vadd.f32 %v54, %v226
    %v228 = vpop.f32.mrb[0].mxu0
    %229 = vmatprep.mubr.f32.mxu0 0.0
    %230 = vmatmul.mubr.f32.gmra.mrb[0].mxu0 %v94
    %v231 = vpop.f32.mrb[0].mxu0
    %v232 = vadd.f32 %v54, %v231
    %v233 = vpop.f32.mrb[0].mxu0
    %234 = vmatprep.mubr.f32.mxu0 0.0
    %235 = vmatmul.mubr.f32.gmra.mrb[0].mxu0 %v97
    %v236 = vpop.f32.mrb[0].mxu0
    %v237 = vadd.f32 %v54, %v236
    %v238 = vpop.f32.mrb[0].mxu0
    %239 = vmatprep.mubr.f32.mxu0 0.0
    %240 = vmatmul.mubr.f32.gmra.mrb[0].mxu0 %v100
    %v241 = vpop.f32.mrb[0].mxu0
    %v242 = vadd.f32 %v54, %v241
    %v243 = vpop.f32.mrb[0].mxu0
    %244 = vmatprep.mubr.f32.mxu0 0.0
    %245 = vmatmul.mubr.f32.gmra.mrb[0].mxu0 %v103
    %v246 = vpop.f32.mrb[0].mxu0
    %v247 = vadd.f32 %v54, %v246
    %v248 = vpop.f32.mrb[0].mxu0
    %249 = vdwg.mxu0
    %v250 = vtanh.pop %v172
    %v251 = vtanh.pop %v177
    %v252 = vtanh.pop %v182
    %v253 = vtanh.pop %v187
    %v254 = vtanh.pop %v192
    %v255 = vtanh.pop %v197
    %v256 = vtanh.pop %v202
    %v257 = vtanh.pop %v207
    %v258 = vtanh.pop %v212
    %v259 = vtanh.pop %v217
    %v260 = vtanh.pop %v222
    %v261 = vtanh.pop %v227
    %v262 = vtanh.pop %v232
    %v263 = vtanh.pop %v237
    %v264 = vtanh.pop %v242
    %v265 = vtanh.pop %v247
    %v266 = vld [vmem:[%s3] sm:$0xff]
    %v267 = vld [vmem:[%s3 + $0x8] sm:$0xff]
    %v268 = vld [vmem:[%s3 + $0x10] sm:$0xff]
    %v269 = vld [vmem:[%s3 + $0x18] sm:$0xff]
    %v270 = vld [vmem:[%s3 + $0x20] sm:$0xff]
    %v271 = vld [vmem:[%s3 + $0x28] sm:$0xff]
    %v272 = vld [vmem:[%s3 + $0x30] sm:$0xff]
    %v273 = vld [vmem:[%s3 + $0x38] sm:$0xff]
    %v274 = vld [vmem:[%s4] sm:$0x1]
    %v276 = vlaneseq
    %v277 = vshrl.u32 %v276, 7
    %v278 = vsub.s32 0, %v277
    %v279 = vrot.slane %v274, %v278
    %vm281 = vcmask 523264
    %v283 = vsel %vm281, %v250, 0
    %v286 = vsel %vm281, %v251, 0
    %v289 = vsel %vm281, %v252, 0
    %v292 = vsel %vm281, %v253, 0
    %v295 = vsel %vm281, %v254, 0
    %v298 = vsel %vm281, %v255, 0
    %v301 = vsel %vm281, %v256, 0
    %v304 = vsel %vm281, %v257, 0
    %v307 = vsel %vm281, %v258, 0
    %v310 = vsel %vm281, %v259, 0
    %v313 = vsel %vm281, %v260, 0
    %v316 = vsel %vm281, %v261, 0
    %v319 = vsel %vm281, %v262, 0
    %v322 = vsel %vm281, %v263, 0
    %v325 = vsel %vm281, %v264, 0
    %v328 = vsel %vm281, %v265, 0
    %330 = vmatprep.subr.mxu0 0.0
    %331 = vmatpush1.msra.mxu0 %v266
    %332 = vmatprep.subr.mxu0 0.0
    %333 = vmatpush1.msra.mxu0 %v267
    %334 = vmatprep.subr.mxu0 0.0
    %335 = vmatpush1.msra.mxu0 %v268
    %336 = vmatprep.subr.mxu0 0.0
    %337 = vmatpush1.msra.mxu0 %v269
    %338 = vmatprep.subr.mxu0 0.0
    %339 = vmatpush1.msra.mxu0 %v270
    %340 = vmatprep.subr.mxu0 0.0
    %341 = vmatpush1.msra.mxu0 %v271
    %342 = vmatprep.subr.mxu0 0.0
    %343 = vmatpush1.msra.mxu0 %v272
    %344 = vmatprep.subr.mxu0 0.0
    %345 = vmatpush1.msra.mxu0 %v273
    %346 = vmatprep.subr.mxu0 0.0
    %347 = vmatpush1.msra.mxu0 0.0
    %348 = vmatprep.subr.mxu0 0.0
    %349 = vmatpush1.msra.mxu0 0.0
    %350 = vmatprep.subr.mxu0 0.0
    %351 = vmatpush1.msra.mxu0 0.0
    %352 = vmatprep.subr.mxu0 0.0
    %353 = vmatpush1.msra.mxu0 0.0
    %354 = vmatprep.subr.mxu0 0.0
    %355 = vmatpush1.msra.mxu0 0.0
    %356 = vmatprep.subr.mxu0 0.0
    %357 = vmatpush1.msra.mxu0 0.0
    %358 = vmatprep.subr.mxu0 0.0
    %359 = vmatpush1.msra.mxu0 0.0
    %360 = vmatprep.subr.mxu0 0.0
    %361 = vmatpush1.msra.mxu0 0.0
    %362 = vmatprep.subr.mxu0 0.0
    %363 = vmatpush1.msra.mxu0 0.0
    %364 = vmatprep.subr.mxu0 0.0
    %365 = vmatpush1.msra.mxu0 0.0
    %366 = vmatprep.subr.mxu0 0.0
    %367 = vmatpush1.msra.mxu0 0.0
    %368 = vmatprep.subr.mxu0 0.0
    %369 = vmatpush1.msra.mxu0 0.0
    %370 = vmatprep.subr.mxu0 0.0
    %371 = vmatpush1.msra.mxu0 0.0
    %372 = vmatprep.subr.mxu0 0.0
    %373 = vmatpush1.msra.mxu0 0.0
    %374 = vmatprep.subr.mxu0 0.0
    %375 = vmatpush1.msra.mxu0 0.0
    %376 = vmatprep.subr.mxu0 0.0
    %377 = vmatpush1.msra.mxu0 0.0
    %378 = vmatprep.subr.mxu0 0.0
    %379 = vmatpush1.msra.mxu0 0.0
    %380 = vmatprep.subr.mxu0 0.0
    %381 = vmatpush1.msra.mxu0 0.0
    %382 = vmatprep.subr.mxu0 0.0
    %383 = vmatpush1.msra.mxu0 0.0
    %384 = vmatprep.subr.mxu0 0.0
    %385 = vmatpush1.msra.mxu0 0.0
    %386 = vmatprep.subr.mxu0 0.0
    %387 = vmatpush1.msra.mxu0 0.0
    %388 = vmatprep.subr.mxu0 0.0
    %389 = vmatpush1.msra.mxu0 0.0
    %390 = vmatprep.subr.mxu0 0.0
    %391 = vmatpush1.msra.mxu0 0.0
    %392 = vmatprep.subr.mxu0 0.0
    %393 = vmatpush1.msra.mxu0 0.0
    %394 = vmatprep.mubr.f32.mxu0 0.0
    %395 = vmatmul.mubr.f32.gmra.mrb[0].mxu0 %v283
    %v396 = vpop.f32.mrb[0].mxu0
    %v397 = vadd.f32 %v279, %v396
    %v398 = vpop.f32.mrb[0].mxu0
    %399 = vmatprep.mubr.f32.mxu0 0.0
    %400 = vmatmul.mubr.f32.gmra.mrb[0].mxu0 %v286
    %v401 = vpop.f32.mrb[0].mxu0
    %v402 = vadd.f32 %v279, %v401
    %v403 = vpop.f32.mrb[0].mxu0
    %404 = vmatprep.mubr.f32.mxu0 0.0
    %405 = vmatmul.mubr.f32.gmra.mrb[0].mxu0 %v289
    %v406 = vpop.f32.mrb[0].mxu0
    %v407 = vadd.f32 %v279, %v406
    %v408 = vpop.f32.mrb[0].mxu0
    %409 = vmatprep.mubr.f32.mxu0 0.0
    %410 = vmatmul.mubr.f32.gmra.mrb[0].mxu0 %v292
    %v411 = vpop.f32.mrb[0].mxu0
    %v412 = vadd.f32 %v279, %v411
    %v413 = vpop.f32.mrb[0].mxu0
    %414 = vmatprep.mubr.f32.mxu0 0.0
    %415 = vmatmul.mubr.f32.gmra.mrb[0].mxu0 %v295
    %v416 = vpop.f32.mrb[0].mxu0
    %v417 = vadd.f32 %v279, %v416
    %v418 = vpop.f32.mrb[0].mxu0
    %419 = vmatprep.mubr.f32.mxu0 0.0
    %420 = vmatmul.mubr.f32.gmra.mrb[0].mxu0 %v298
    %v421 = vpop.f32.mrb[0].mxu0
    %v422 = vadd.f32 %v279, %v421
    %v423 = vpop.f32.mrb[0].mxu0
    %424 = vmatprep.mubr.f32.mxu0 0.0
    %425 = vmatmul.mubr.f32.gmra.mrb[0].mxu0 %v301
    %v426 = vpop.f32.mrb[0].mxu0
    %v427 = vadd.f32 %v279, %v426
    %v428 = vpop.f32.mrb[0].mxu0
    %429 = vmatprep.mubr.f32.mxu0 0.0
    %430 = vmatmul.mubr.f32.gmra.mrb[0].mxu0 %v304
    %v431 = vpop.f32.mrb[0].mxu0
    %v432 = vadd.f32 %v279, %v431
    %v433 = vpop.f32.mrb[0].mxu0
    %434 = vmatprep.mubr.f32.mxu0 0.0
    %435 = vmatmul.mubr.f32.gmra.mrb[0].mxu0 %v307
    %v436 = vpop.f32.mrb[0].mxu0
    %v437 = vadd.f32 %v279, %v436
    %v438 = vpop.f32.mrb[0].mxu0
    %439 = vmatprep.mubr.f32.mxu0 0.0
    %440 = vmatmul.mubr.f32.gmra.mrb[0].mxu0 %v310
    %v441 = vpop.f32.mrb[0].mxu0
    %v442 = vadd.f32 %v279, %v441
    %v443 = vpop.f32.mrb[0].mxu0
    %444 = vmatprep.mubr.f32.mxu0 0.0
    %445 = vmatmul.mubr.f32.gmra.mrb[0].mxu0 %v313
    %v446 = vpop.f32.mrb[0].mxu0
    %v447 = vadd.f32 %v279, %v446
    %v448 = vpop.f32.mrb[0].mxu0
    %449 = vmatprep.mubr.f32.mxu0 0.0
    %450 = vmatmul.mubr.f32.gmra.mrb[0].mxu0 %v316
    %v451 = vpop.f32.mrb[0].mxu0
    %v452 = vadd.f32 %v279, %v451
    %v453 = vpop.f32.mrb[0].mxu0
    %454 = vmatprep.mubr.f32.mxu0 0.0
    %455 = vmatmul.mubr.f32.gmra.mrb[0].mxu0 %v319
    %v456 = vpop.f32.mrb[0].mxu0
    %v457 = vadd.f32 %v279, %v456
    %v458 = vpop.f32.mrb[0].mxu0
    %459 = vmatprep.mubr.f32.mxu0 0.0
    %460 = vmatmul.mubr.f32.gmra.mrb[0].mxu0 %v322
    %v461 = vpop.f32.mrb[0].mxu0
    %v462 = vadd.f32 %v279, %v461
    %v463 = vpop.f32.mrb[0].mxu0
    %464 = vmatprep.mubr.f32.mxu0 0.0
    %465 = vmatmul.mubr.f32.gmra.mrb[0].mxu0 %v325
    %v466 = vpop.f32.mrb[0].mxu0
    %v467 = vadd.f32 %v279, %v466
    %v468 = vpop.f32.mrb[0].mxu0
    %469 = vmatprep.mubr.f32.mxu0 0.0
    %470 = vmatmul.mubr.f32.gmra.mrb[0].mxu0 %v328
    %v471 = vpop.f32.mrb[0].mxu0
    %v472 = vadd.f32 %v279, %v471
    %v473 = vpop.f32.mrb[0].mxu0
    %474 = vdwg.mxu0
    %v475 = vtanh.pop %v397
    %v476 = vtanh.pop %v402
    %v477 = vtanh.pop %v407
    %v478 = vtanh.pop %v412
    %v479 = vtanh.pop %v417
    %v480 = vtanh.pop %v422
    %v481 = vtanh.pop %v427
    %v482 = vtanh.pop %v432
    %v483 = vtanh.pop %v437
    %v484 = vtanh.pop %v442
    %v485 = vtanh.pop %v447
    %v486 = vtanh.pop %v452
    %v487 = vtanh.pop %v457
    %v488 = vtanh.pop %v462
    %v489 = vtanh.pop %v467
    %v490 = vtanh.pop %v472
    %v491 = vld [vmem:[%s5] sm:$0x1]
    %v492 = vld [vmem:[#allocation2] sm:$0x1]
    %494 = vset.pattern.permute.xlu0 0
    %495 = vperm.xlu0 %494, %v492
    %v496 = vpop.permute.xlu0 %495
    %v498 = vlaneseq
    %v499 = vshrl.u32 %v498, 7
    %v500 = vsub.s32 0, %v499
    %v501 = vrot.slane %v496, %v500
    %vm502 = vcmask 130048
    %v504 = vsel %vm502, %v491, 0
    %v507 = vsel %vm502, %v475, 0
    %v510 = vsel %vm502, %v476, 0
    %v513 = vsel %vm502, %v477, 0
    %v516 = vsel %vm502, %v478, 0
    %v519 = vsel %vm502, %v479, 0
    %v522 = vsel %vm502, %v480, 0
    %v525 = vsel %vm502, %v481, 0
    %v528 = vsel %vm502, %v482, 0
    %v531 = vsel %vm502, %v483, 0
    %v534 = vsel %vm502, %v484, 0
    %v537 = vsel %vm502, %v485, 0
    %v540 = vsel %vm502, %v486, 0
    %v543 = vsel %vm502, %v487, 0
    %v546 = vsel %vm502, %v488, 0
    %v549 = vsel %vm502, %v489, 0
    %v552 = vsel %vm502, %v490, 0
    %554 = vmatprep.subr.mxu0 0.0
    %555 = vmatpush1.xpose.msra.mxu0 %v507
    %556 = vmatprep.subr.mxu0 0.0
    %557 = vmatpush1.xpose.msra.mxu0 %v510
    %558 = vmatprep.subr.mxu0 0.0
    %559 = vmatpush1.xpose.msra.mxu0 %v513
    %560 = vmatprep.subr.mxu0 0.0
    %561 = vmatpush1.xpose.msra.mxu0 %v516
    %562 = vmatprep.subr.mxu0 0.0
    %563 = vmatpush1.xpose.msra.mxu0 %v519
    %564 = vmatprep.subr.mxu0 0.0
    %565 = vmatpush1.xpose.msra.mxu0 %v522
    %566 = vmatprep.subr.mxu0 0.0
    %567 = vmatpush1.xpose.msra.mxu0 %v525
    %568 = vmatprep.subr.mxu0 0.0
    %569 = vmatpush1.xpose.msra.mxu0 %v528
    %570 = vmatprep.subr.mxu0 0.0
    %571 = vmatpush1.xpose.msra.mxu0 %v531
    %572 = vmatprep.subr.mxu0 0.0
    %573 = vmatpush1.xpose.msra.mxu0 %v534
    %574 = vmatprep.subr.mxu0 0.0
    %575 = vmatpush1.xpose.msra.mxu0 %v537
    %576 = vmatprep.subr.mxu0 0.0
    %577 = vmatpush1.xpose.msra.mxu0 %v540
    %578 = vmatprep.subr.mxu0 0.0
    %579 = vmatpush1.xpose.msra.mxu0 %v543
    %580 = vmatprep.subr.mxu0 0.0
    %581 = vmatpush1.xpose.msra.mxu0 %v546
    %582 = vmatprep.subr.mxu0 0.0
    %583 = vmatpush1.xpose.msra.mxu0 %v549
    %584 = vmatprep.subr.mxu0 0.0
    %585 = vmatpush1.xpose.msra.mxu0 %v552
    %586 = vmatprep.subr.mxu0 0.0
    %587 = vmatpush1.xpose.msra.mxu0 0.0
    %588 = vmatprep.subr.mxu0 0.0
    %589 = vmatpush1.xpose.msra.mxu0 0.0
    %590 = vmatprep.subr.mxu0 0.0
    %591 = vmatpush1.xpose.msra.mxu0 0.0
    %592 = vmatprep.subr.mxu0 0.0
    %593 = vmatpush1.xpose.msra.mxu0 0.0
    %594 = vmatprep.subr.mxu0 0.0
    %595 = vmatpush1.xpose.msra.mxu0 0.0
    %596 = vmatprep.subr.mxu0 0.0
    %597 = vmatpush1.xpose.msra.mxu0 0.0
    %598 = vmatprep.subr.mxu0 0.0
    %599 = vmatpush1.xpose.msra.mxu0 0.0
    %600 = vmatprep.subr.mxu0 0.0
    %601 = vmatpush1.xpose.msra.mxu0 0.0
    %602 = vmatprep.subr.mxu0 0.0
    %603 = vmatpush1.xpose.msra.mxu0 0.0
    %604 = vmatprep.subr.mxu0 0.0
    %605 = vmatpush1.xpose.msra.mxu0 0.0
    %606 = vmatprep.subr.mxu0 0.0
    %607 = vmatpush1.xpose.msra.mxu0 0.0
    %608 = vmatprep.subr.mxu0 0.0
    %609 = vmatpush1.xpose.msra.mxu0 0.0
    %610 = vmatprep.subr.mxu0 0.0
    %611 = vmatpush1.xpose.msra.mxu0 0.0
    %612 = vmatprep.subr.mxu0 0.0
    %613 = vmatpush1.xpose.msra.mxu0 0.0
    %614 = vmatprep.subr.mxu0 0.0
    %615 = vmatpush1.xpose.msra.mxu0 0.0
    %616 = vmatprep.subr.mxu0 0.0
    %617 = vmatpush1.xpose.msra.mxu0 0.0
    %618 = vmatprep.mubr.f32.mxu0 0.0
    %619 = vmatmul.mubr.f32.gmra.mrb[0].mxu0 %v504
    %v620 = vpop.f32.mrb[0].mxu0
    %v621 = vadd.f32 %v501, %v620
    %v622 = vpop.f32.mrb[0].mxu0
    %623 = vdwg.mxu0
    %624 = vst [vmem:[#allocation3] sm:$0x1] %v621
    // Predicated region
    $region30: #{tpu_custom_call.1} parent=1 // pred_check
      _
    $region31: #{tpu_custom_call.1} parent=1 // pred_check_branch
      %626 = sbr.rel (0) target = $region33
    $region32: #{tpu_custom_call.1} parent=1 // pred_region
      %s628 = ssub.s32 16, 16
      %629 = vsyncadd [#allocation4], %s628
      %s631 = sshll.u32 [#allocation3], 4
      %s632 = int_to_ptr.vmem [resolvable:$true] %s631
      %634 = dma.vmem_to_hbm [thread:$0]  %s632, 16, %s7, [#allocation4]
    $region33: #{tpu_custom_call.1} parent=1 // pred_fallthru
      _
    // Predicated region
    $region34: #{tpu_custom_call.1} parent=1 // pred_check
      _
    $region35: #{tpu_custom_call.1} parent=1 // pred_check_branch
      %636 = sbr.rel (0) target = $region37
    $region36: #{tpu_custom_call.1} parent=1 // pred_region
      %637 = dma.done [#allocation4], 16
    $region37: #{tpu_custom_call.1} parent=1 // pred_fallthru
      _
    %638 = vsyncpa [#allocation4], 1

</llo_original>
